<compile_context>
chip_gen: v6e
topology: v6e:2x2x1
jax: 0.10.0
libtpu: 0.0.40
codegen_flags: <defaults>
</compile_context>

<pallas_src>
import jax
import jax.numpy as jnp
from jax.experimental import pallas as pl
from jax.experimental.pallas import tpu as pltpu

_LANES = 128      # vreg lane width
_SUBLANES = 8     # vreg sublane depth


def conv1d_hardsigmoid_kernel(x_ref, w0_ref, w1_ref, o_ref):
    """Fused conv1d(K=2, padding='same') + hardsigmoid.

    x_ref : (8, 128) f32 — row 0 holds the signal x[0:L] (L < 128); every other
            entry is zero (the zero at lane L is the 'same' right-pad).
    w0_ref: (Cout, 1) f32 — conv tap k=0.
    w1_ref: (Cout, 1) f32 — conv tap k=1.
    o_ref : (Cout, 128) f32 — out[oc, t] = hardsigmoid(w0*x[t] + w1*x[t+1]);
            lanes >= L are don't-care and sliced off by the wrapper.
    """
    xbuf = x_ref[...]                                    # (8, 128): one vreg

    # x[t+1] via one XLU lane rotate (shift 127 == -1 mod 128). The wrapped
    # x[0] lands in lane 127, outside the kept region; lane L-1 picks up the
    # wrapper's zero at lane L, i.e. the padding='same' zero.
    xnext = pltpu.roll(xbuf, shift=_LANES - 1, axis=1)   # (8, 128)

    x_row = xbuf[0:1, :]                                 # (1, 128)
    xn_row = xnext[0:1, :]                               # (1, 128)

    # Fold the hardsigmoid 1/6 into the single-column weight vregs (in-kernel,
    # not pre-scaled in the wrapper).
    w0s = w0_ref[...] * (1.0 / 6.0)                      # (Cout, 1)
    w1s = w1_ref[...] * (1.0 / 6.0)                      # (Cout, 1)

    v = w0s * x_row + w1s * xn_row                       # (Cout, 128): VPU FMAs
    # hardsigmoid: clamp(v7 + 3, 0, 6) / 6 == clamp(v7/6 + 0.5, 0, 1)
    o_ref[...] = jnp.clip(v + 0.5, 0.0, 1.0)


@jax.jit
def model_forward(x1, weight):
    """
    x1:     (1, 1, L)    float32 (PyTorch NCL input), L < 128
    weight: (Cout, 1, 2) float32 (conv1d weight, K=2)
    returns (1, Cout, L) float32 = hardsigmoid(conv1d(x1, weight, padding='same'))
    """
    _, _, L = x1.shape
    cout, _, k = weight.shape
    assert k == 2 and L < _LANES, (k, L)

    # Layout plumbing only (tiny arrays; no compute hoisted):
    #  - zero-padded single-vreg signal buffer (row 0 = x, rest zeros)
    #  - the two conv taps as lane-0 columns.
    xbuf = jnp.pad(x1.reshape(1, L), ((0, _SUBLANES - 1), (0, _LANES - L)))
    w0 = weight[:, 0, 0:1]                               # (Cout, 1)
    w1 = weight[:, 0, 1:2]                               # (Cout, 1)

    out_cl = pl.pallas_call(
        conv1d_hardsigmoid_kernel,
        out_shape=jax.ShapeDtypeStruct((cout, _LANES), jnp.float32),
        in_specs=[
            pl.BlockSpec(memory_space=pltpu.MemorySpace.VMEM),
            pl.BlockSpec(memory_space=pltpu.MemorySpace.VMEM),
            pl.BlockSpec(memory_space=pltpu.MemorySpace.VMEM),
        ],
        out_specs=pl.BlockSpec(memory_space=pltpu.MemorySpace.VMEM),
    )(xbuf, w0, w1)

    return out_cl[None, :, :L]                           # (1, Cout, L)


def reference_forward(x1, weight):
    """Pure-JAX reference of the PyTorch forward (elementwise only; exact)."""
    x = x1[0, 0]                                                  # (L,)
    x_shift = jnp.concatenate([x[1:], jnp.zeros((1,), x.dtype)])  # x[t+1], 0-pad
    w0 = weight[:, 0, 0][:, None]                                 # (Cout, 1)
    w1 = weight[:, 0, 1][:, None]                                 # (Cout, 1)
    v7 = w0 * x[None, :] + w1 * x_shift[None, :]                  # (Cout, L)
    v11 = jnp.clip(v7 + 3.0, 0.0, 6.0) / 6.0
    return v11[None]


if __name__ == "__main__":
    key = jax.random.PRNGKey(0)
    k_x, k_w = jax.random.split(key)

    L, Cout, K = 64, 50, 2
    x1 = jax.random.normal(k_x, (1, 1, L), dtype=jnp.float32)
    # TODO(synk): the PyTorch module draws torch.randn weights inside forward();
    # here the weight is a deterministic kernel input so kernel and reference match.
    weight = jax.random.normal(k_w, (Cout, 1, K), dtype=jnp.float32)

    out = jax.block_until_ready(model_forward(x1, weight))
    ref = reference_forward(x1, weight)

    assert out.shape == (1, Cout, L), out.shape
    assert jnp.allclose(out, ref, atol=1e-5, rtol=1e-5), float(jnp.abs(out - ref).max())
    print("KERNEL_OK")
</pallas_src>

<mosaic_0001>
module attributes {stable_mosaic.version = 11 : i64} {
  func.func @conv1d_hardsigmoid_kernel(%arg0: memref<8x128xf32, #tpu.memory_space<vmem>>, %arg1: memref<50x1xf32, #tpu.memory_space<vmem>>, %arg2: memref<50x1xf32, #tpu.memory_space<vmem>>, %arg3: memref<50x128xf32, #tpu.memory_space<vmem>>) attributes {dimension_semantics = [], scalar_prefetch = 0 : i64, scratch_operands = 0 : i64, tpu.core_type = #tpu.core_type<tc>} {
    %c0 = arith.constant 0 : index
    %c0_0 = arith.constant 0 : index
    %0 = vector.load %arg0[%c0, %c0_0] : memref<8x128xf32, #tpu.memory_space<vmem>>, vector<8x128xf32>
    %c127_i32 = arith.constant 127 : i32
    %1 = tpu.dynamic_rotate %0 by %c127_i32 dim 1 : vector<8x128xf32>, i32 -> vector<8x128xf32>
    %2 = vector.extract_strided_slice %0 {offsets = [0, 0], sizes = [1, 128], strides = [1, 1]} : vector<8x128xf32> to vector<1x128xf32>
    %3 = vector.extract_strided_slice %1 {offsets = [0, 0], sizes = [1, 128], strides = [1, 1]} : vector<8x128xf32> to vector<1x128xf32>
    %c0_1 = arith.constant 0 : index
    %c0_2 = arith.constant 0 : index
    %4 = vector.load %arg1[%c0_1, %c0_2] : memref<50x1xf32, #tpu.memory_space<vmem>>, vector<50x1xf32>
    %cst = arith.constant 0.166666672 : f32
    %5 = vector.broadcast %cst : f32 to vector<50x1xf32>
    %6 = arith.mulf %4, %5 : vector<50x1xf32>
    %c0_3 = arith.constant 0 : index
    %c0_4 = arith.constant 0 : index
    %7 = vector.load %arg2[%c0_3, %c0_4] : memref<50x1xf32, #tpu.memory_space<vmem>>, vector<50x1xf32>
    %cst_5 = arith.constant 0.166666672 : f32
    %8 = vector.broadcast %cst_5 : f32 to vector<50x1xf32>
    %9 = arith.mulf %7, %8 : vector<50x1xf32>
    %10 = vector.broadcast %6 : vector<50x1xf32> to vector<50x128xf32>
    %11 = vector.broadcast %2 : vector<1x128xf32> to vector<50x128xf32>
    %12 = arith.mulf %10, %11 : vector<50x128xf32>
    %13 = vector.broadcast %9 : vector<50x1xf32> to vector<50x128xf32>
    %14 = vector.broadcast %3 : vector<1x128xf32> to vector<50x128xf32>
    %15 = arith.mulf %13, %14 : vector<50x128xf32>
    %16 = arith.addf %12, %15 : vector<50x128xf32>
    %cst_6 = arith.constant 5.000000e-01 : f32
    %17 = vector.broadcast %cst_6 : f32 to vector<50x128xf32>
    %18 = arith.addf %16, %17 : vector<50x128xf32>
    %cst_7 = arith.constant 0.000000e+00 : f32
    %cst_8 = arith.constant 1.000000e+00 : f32
    %19 = vector.broadcast %cst_7 : f32 to vector<50x128xf32>
    %20 = arith.maximumf %19, %18 : vector<50x128xf32>
    %21 = vector.broadcast %cst_8 : f32 to vector<50x128xf32>
    %22 = arith.minimumf %21, %20 : vector<50x128xf32>
    %c0_9 = arith.constant 0 : index
    %c0_10 = arith.constant 0 : index
    %23 = vector.load %arg3[%c0_9, %c0_10] : memref<50x128xf32, #tpu.memory_space<vmem>>, vector<50x128xf32>
    tpu.vector_store %arg3[%c0_9, %c0_10], %22 {strides = array<i32>} : memref<50x128xf32, #tpu.memory_space<vmem>>, vector<50x128xf32>,
    return
  }
}

</mosaic_0001>

<llo_original>
// kernel: model_forward.1
$region0: #{model_forward.1}
  #allocation0 [shape = 'u32[]', space=smem, size = 0x4, offset = 0x4, fixed_abs, tag = 'smem constant byte address 0x4 - core index']
  #allocation1 [shape = 'u32[144,128]{1,0:T(1,128)}', space=vmem, size = 0x12000, scoped, tag = 'internal scratch']
  %s0 = inlined_call_operand.vmem [shape: f32[8,128], index: 0, kind: input, shape index: {}]
  %s1 = inlined_call_operand.vmem [shape: f32[50,1], index: 1, kind: input, shape index: {}]
  %s2 = inlined_call_operand.vmem [shape: f32[50,1], index: 2, kind: input, shape index: {}]
  %s3 = inlined_call_operand.vmem [shape: f32[50,128], index: 3, kind: output, shape index: {}]
  %s4 = sld [smem:[#allocation0]]
  $region22: #{model_forward.1} parent=0
    _
  %s6 = ssub.s32 1, %s4
  %s7 = scalar_select 0, %s6, %s4
  // Predicated region
  $region2: #{model_forward.1} parent=0 // pred_check
    _
  $region3: #{model_forward.1} parent=0 // pred_check_branch
    %9 = sbr.rel (0) target = $region5
  $region4: #{model_forward.1} parent=0 // pred_region
    _
  $region5: #{model_forward.1} parent=0 // pred_fallthru
    _
  // Predicated region
  $region6: #{model_forward.1} parent=0 // pred_check
    _
  $region7: #{model_forward.1} parent=0 // pred_check_branch
    %11 = sbr.rel (0) target = $region9
  $region8: #{model_forward.1} parent=0 // pred_region
    _
  $region9: #{model_forward.1} parent=0 // pred_fallthru
    _
  // Predicated region
  $region10: #{model_forward.1} parent=0 // pred_check
    _
  $region11: #{model_forward.1} parent=0 // pred_check_branch
    %13 = sbr.rel (0) target = $region13
  $region12: #{model_forward.1} parent=0 // pred_region
    _
  $region13: #{model_forward.1} parent=0 // pred_fallthru
    _
  %v14 = vld [vmem:[%s0] sm:$0xff]
  %15 = vrot.lane.b32.xlu0 %v14, 127
  %v16 = vpop.permute.xlu0 %15
  %v17 = vld [vmem:[%s1] sm:$0xff]
  %v18 = vld [vmem:[%s1 + $0x8] sm:$0xff]
  %v19 = vld [vmem:[%s1 + $0x10] sm:$0xff]
  %v20 = vld [vmem:[%s1 + $0x18] sm:$0xff]
  %v21 = vld [vmem:[%s1 + $0x20] sm:$0xff]
  %v22 = vld [vmem:[%s1 + $0x28] sm:$0xff]
  %v23 = vld [vmem:[%s1 + $0x30] sm:$0x3]
  %v24 = vmul.f32 %v17, 0.16666667
  %v25 = vmul.f32 %v18, 0.16666667
  %v26 = vmul.f32 %v19, 0.16666667
  %v27 = vmul.f32 %v20, 0.16666667
  %v28 = vmul.f32 %v21, 0.16666667
  %v29 = vmul.f32 %v22, 0.16666667
  %v30 = vmul.f32 %v23, 0.16666667
  %v31 = vld [vmem:[%s2] sm:$0xff]
  %v32 = vld [vmem:[%s2 + $0x8] sm:$0xff]
  %v33 = vld [vmem:[%s2 + $0x10] sm:$0xff]
  %v34 = vld [vmem:[%s2 + $0x18] sm:$0xff]
  %v35 = vld [vmem:[%s2 + $0x20] sm:$0xff]
  %v36 = vld [vmem:[%s2 + $0x28] sm:$0xff]
  %v37 = vld [vmem:[%s2 + $0x30] sm:$0x3]
  %v38 = vmul.f32 %v31, 0.16666667
  %v39 = vmul.f32 %v32, 0.16666667
  %v40 = vmul.f32 %v33, 0.16666667
  %v41 = vmul.f32 %v34, 0.16666667
  %v42 = vmul.f32 %v35, 0.16666667
  %v43 = vmul.f32 %v36, 0.16666667
  %v44 = vmul.f32 %v37, 0.16666667
  %46 = vset.pattern.permute.xlu0 0
  %47 = vperm.xlu0 %46, %v24
  %v48 = vpop.permute.xlu0 %47
  %51 = vset.pattern.permute.xlu0 0
  %52 = vperm.xlu0 %51, %v25
  %v53 = vpop.permute.xlu0 %52
  %56 = vset.pattern.permute.xlu0 0
  %57 = vperm.xlu0 %56, %v26
  %v58 = vpop.permute.xlu0 %57
  %61 = vset.pattern.permute.xlu0 0
  %62 = vperm.xlu0 %61, %v27
  %v63 = vpop.permute.xlu0 %62
  %66 = vset.pattern.permute.xlu0 0
  %67 = vperm.xlu0 %66, %v28
  %v68 = vpop.permute.xlu0 %67
  %71 = vset.pattern.permute.xlu0 0
  %72 = vperm.xlu0 %71, %v29
  %v73 = vpop.permute.xlu0 %72
  %76 = vset.pattern.permute.xlu0 0
  %77 = vperm.xlu0 %76, %v30
  %v78 = vpop.permute.xlu0 %77
  %v80 = vlaneseq
  %v81 = vshrl.u32 %v80, 7
  %v82 = vsub.s32 0, %v81
  %v83 = vrot.slane %v14, %v82
  %v84 = vmul.f32 %v48, %v83
  %v85 = vmul.f32 %v53, %v83
  %v86 = vmul.f32 %v58, %v83
  %v87 = vmul.f32 %v63, %v83
  %v88 = vmul.f32 %v68, %v83
  %v89 = vmul.f32 %v73, %v83
  %v90 = vmul.f32 %v78, %v83
  %92 = vset.pattern.permute.xlu0 0
  %93 = vperm.xlu0 %92, %v38
  %v94 = vpop.permute.xlu0 %93
  %97 = vset.pattern.permute.xlu0 0
  %98 = vperm.xlu0 %97, %v39
  %v99 = vpop.permute.xlu0 %98
  %102 = vset.pattern.permute.xlu0 0
  %103 = vperm.xlu0 %102, %v40
  %v104 = vpop.permute.xlu0 %103
  %107 = vset.pattern.permute.xlu0 0
  %108 = vperm.xlu0 %107, %v41
  %v109 = vpop.permute.xlu0 %108
  %112 = vset.pattern.permute.xlu0 0
  %113 = vperm.xlu0 %112, %v42
  %v114 = vpop.permute.xlu0 %113
  %117 = vset.pattern.permute.xlu0 0
  %118 = vperm.xlu0 %117, %v43
  %v119 = vpop.permute.xlu0 %118
  %122 = vset.pattern.permute.xlu0 0
  %123 = vperm.xlu0 %122, %v44
  %v124 = vpop.permute.xlu0 %123
  %v126 = vlaneseq
  %v127 = vshrl.u32 %v126, 7
  %v128 = vsub.s32 0, %v127
  %v129 = vrot.slane %v16, %v128
  %v130 = vmul.f32 %v94, %v129
  %v131 = vmul.f32 %v99, %v129
  %v132 = vmul.f32 %v104, %v129
  %v133 = vmul.f32 %v109, %v129
  %v134 = vmul.f32 %v114, %v129
  %v135 = vmul.f32 %v119, %v129
  %v136 = vmul.f32 %v124, %v129
  %v137 = vadd.f32 %v84, %v130
  %v138 = vadd.f32 %v85, %v131
  %v139 = vadd.f32 %v86, %v132
  %v140 = vadd.f32 %v87, %v133
  %v141 = vadd.f32 %v88, %v134
  %v142 = vadd.f32 %v89, %v135
  %v143 = vadd.f32 %v90, %v136
  %v144 = vadd.f32 %v137, 0.5
  %v145 = vadd.f32 %v138, 0.5
  %v146 = vadd.f32 %v139, 0.5
  %v147 = vadd.f32 %v140, 0.5
  %v148 = vadd.f32 %v141, 0.5
  %v149 = vadd.f32 %v142, 0.5
  %v150 = vadd.f32 %v143, 0.5
  %v151 = vmax.f32 %v144, 0.0
  %v152 = vmax.f32 %v145, 0.0
  %v153 = vmax.f32 %v146, 0.0
  %v154 = vmax.f32 %v147, 0.0
  %v155 = vmax.f32 %v148, 0.0
  %v156 = vmax.f32 %v149, 0.0
  %v157 = vmax.f32 %v150, 0.0
  %v158 = vmin.f32 %v151, 1.0
  %v159 = vmin.f32 %v152, 1.0
  %v160 = vmin.f32 %v153, 1.0
  %v161 = vmin.f32 %v154, 1.0
  %v162 = vmin.f32 %v155, 1.0
  %v163 = vmin.f32 %v156, 1.0
  %v164 = vmin.f32 %v157, 1.0
  %165 = vst [vmem:[%s3] sm:$0xff] %v158
  %166 = vst [vmem:[%s3 + $0x8] sm:$0xff] %v159
  %167 = vst [vmem:[%s3 + $0x10] sm:$0xff] %v160
  %168 = vst [vmem:[%s3 + $0x18] sm:$0xff] %v161
  %169 = vst [vmem:[%s3 + $0x20] sm:$0xff] %v162
  %170 = vst [vmem:[%s3 + $0x28] sm:$0xff] %v163
  %171 = vst [vmem:[%s3 + $0x30] sm:$0x3] %v164
  // Predicated region
  $region14: #{model_forward.1} parent=0 // pred_check
    _
  $region15: #{model_forward.1} parent=0 // pred_check_branch
    %173 = sbr.rel (0) target = $region17
  $region16: #{model_forward.1} parent=0 // pred_region
    _
  $region17: #{model_forward.1} parent=0 // pred_fallthru
    _
  // Predicated region
  $region18: #{model_forward.1} parent=0 // pred_check
    _
  $region19: #{model_forward.1} parent=0 // pred_check_branch
    %175 = sbr.rel (0) target = $region21
  $region20: #{model_forward.1} parent=0 // pred_region
    _
  $region21: #{model_forward.1} parent=0 // pred_fallthru
    _

</llo_original>
